<compile_context>
chip_gen: v7x
topology: tpu7x:2x2x1
jax: 0.10.0
libtpu: 0.0.40
codegen_flags: <defaults>
</compile_context>

<pallas_src>
import jax
import jax.numpy as jnp
from jax.experimental import pallas as pl
from jax.experimental.pallas import tpu as pltpu


def _round_up(x, m):
    return (x + m - 1) // m * m


def _patch_embed_kernel(patches_ref, w_ref, pos_ref, out_ref):
    # patches_ref: (Tb*Npad, Kpad) bf16 -- Tb images' padded/flattened patches
    #                                      (row 0 of each image is zeros = cls slot)
    # w_ref:       (Kpad, Epad)    bf16 -- conv weight as a projection matrix
    # pos_ref:     (Tb*Npad, Epad) f32  -- pre-tiled positions with conv bias
    #                                      folded into patch rows and
    #                                      cls_token folded into row 0
    # out_ref:     (Tb*Npad, Epad) f32
    proj = jnp.dot(patches_ref[...], w_ref[...],
                   preferred_element_type=jnp.float32)
    out_ref[...] = (proj + pos_ref[...]).astype(out_ref.dtype)


def _choose_block_batch(B, Npad, Kpad, Epad, *, target_rows=1024,
                        vmem_budget_bytes=24 << 20):
    """Pick Tb (images per grid step).

    Constraints: Tb divides B; grid has >= 2 steps when B >= 2 (so both v7x
    TensorCores get work); Tb*Npad stays near target_rows; double-buffered
    working set stays under the budget.  Returns (Tb, working_set_bytes).
    """

    def vmem_bytes(tb):
        rows = tb * Npad
        patches = 2 * rows * Kpad * 2            # bf16 input, double-buffered
        out = 2 * rows * Epad * 4                # f32 output, double-buffered
        resident = Kpad * Epad * 2 + rows * Epad * 4   # weight + tiled pos
        return patches + out + resident

    max_tb = max(1, B // 2) if B >= 2 else 1
    cap = max(1, target_rows // max(Npad, 1))
    best = 1
    for tb in range(1, B + 1):
        if (B % tb == 0 and tb <= max_tb and tb <= cap
                and vmem_bytes(tb) <= vmem_budget_bytes):
            best = tb
    return best, vmem_bytes(best)


def patch_embedding(x, conv_w, conv_b, cls_token, positions, patch_size,
                    *, block_batch=None):
    """x: (B, C, H, W) NCHW float32 -> (B, N+1, E) float32."""
    B, C, H, W = x.shape
    P = patch_size
    E = conv_w.shape[0]
    Hp, Wp = H // P, W // P
    N = Hp * Wp
    K = C * P * P
    S = N + 1                       # sequence length incl. cls token
    out_dtype = x.dtype

    # Padded, hardware-aligned sizes.
    Npad = _round_up(S, 8)          # sublane-aligned rows per image
    Kpad = _round_up(K, 128)        # lane-aligned contraction dim
    Epad = _round_up(E, 128)        # lane-aligned embedding dim

    # --- glue: extract non-overlapping patches in (C, kh, kw) order, bf16 ---
    xb = x.astype(jnp.bfloat16)
    patches = xb.reshape(B, C, Hp, P, Wp, P)
    patches = patches.transpose(0, 2, 4, 1, 3, 5).reshape(B, N, K)   # (B, N, K)
    # Row 0 per image = zeros (cls slot, folded into matmul); pad rows/K.
    patches = jnp.pad(patches, ((0, 0), (1, Npad - S), (0, Kpad - K)))
    patches2d = patches.reshape(B * Npad, Kpad)                      # (B*Npad, Kpad)

    w_mat = conv_w.reshape(E, K).T.astype(jnp.bfloat16)              # (K, E)
    w_mat = jnp.pad(w_mat, ((0, Kpad - K), (0, Epad - E)))           # (Kpad, Epad)

    pos = positions.reshape(S, E).astype(jnp.float32)
    pos_folded = jnp.concatenate(
        [cls_token.reshape(1, E).astype(jnp.float32) + pos[0:1],      # cls row
         pos[1:] + conv_b.reshape(1, E).astype(jnp.float32)],         # patch rows
        axis=0)                                                       # (S, E)
    pos_folded = jnp.pad(pos_folded, ((0, Npad - S), (0, Epad - E)))  # (Npad, Epad)

    if block_batch is not None:
        Tb = block_batch
        _, ws_bytes = _choose_block_batch(B, Npad, Kpad, Epad)
        ws_bytes = max(ws_bytes, Tb * Npad * (Kpad * 2 + Epad * 4) * 2)
    else:
        Tb, ws_bytes = _choose_block_batch(B, Npad, Kpad, Epad)
    assert B % Tb == 0, (B, Tb)
    grid = (B // Tb,)

    # Positions pre-tiled over the Tb images in a block (small, resident).
    pos_tiled = jnp.tile(pos_folded, (Tb, 1))                         # (Tb*Npad, Epad)

    rows = Tb * Npad
    vmem_limit = min(max(32 << 20, int(ws_bytes * 1.25)), 128 << 20)

    out2d = pl.pallas_call(
        _patch_embed_kernel,
        out_shape=jax.ShapeDtypeStruct((B * Npad, Epad), jnp.float32),
        grid_spec=pltpu.PrefetchScalarGridSpec(
            num_scalar_prefetch=0,
            grid=grid,
            in_specs=[
                pl.BlockSpec((rows, Kpad), lambda b: (b, 0)),
                pl.BlockSpec((Kpad, Epad), lambda b: (0, 0)),
                pl.BlockSpec((rows, Epad), lambda b: (0, 0)),
            ],
            out_specs=pl.BlockSpec((rows, Epad), lambda b: (b, 0)),
        ),
        compiler_params=pltpu.CompilerParams(
            dimension_semantics=("parallel",),
            vmem_limit_bytes=vmem_limit,
        ),
    )(patches2d, w_mat, pos_tiled)

    # Drop alignment padding; this is a view when no padding was needed.
    out = out2d.reshape(B, Npad, Epad)[:, :S, :E].astype(out_dtype)
    return out


def patch_embedding_ref(x, conv_w, conv_b, cls_token, positions, patch_size):
    """Pure-JAX f32 reference using lax.conv (matches PyTorch Conv2d semantics)."""
    B = x.shape[0]
    E = conv_w.shape[0]
    y = jax.lax.conv_general_dilated(
        x, conv_w,
        window_strides=(patch_size, patch_size),
        padding="VALID",
        dimension_numbers=("NCHW", "OIHW", "NCHW"),
    )  # (B, E, Hp, Wp)
    y = y + conv_b.reshape(1, E, 1, 1)
    Bc, Ec, Hp, Wp = y.shape
    y = y.reshape(Bc, Ec, Hp * Wp).transpose(0, 2, 1)          # b (h w) e
    cls = jnp.broadcast_to(cls_token.reshape(1, 1, E), (B, 1, E))
    y = jnp.concatenate([cls, y], axis=1)
    y = y + positions[None, :, :]
    return y


if __name__ == "__main__":
    # Small shapes consistent with the module:
    #   batch=2, in_channels=4, img_size=16, patch_size=4, emb_size=32
    #   -> num_patches = (16/4)^2 = 16, seq_len = 17
    B, C, IMG, P, E = 2, 4, 16, 4, 32
    N = (IMG // P) ** 2

    key = jax.random.PRNGKey(0)
    k_x, k_w, k_b, k_cls, k_pos = jax.random.split(key, 5)

    x = jax.random.normal(k_x, (B, C, IMG, IMG), dtype=jnp.float32)
    conv_w = jax.random.normal(k_w, (E, C, P, P), dtype=jnp.float32) * 0.02
    conv_b = jax.random.normal(k_b, (E,), dtype=jnp.float32) * 0.02
    cls_token = jax.random.normal(k_cls, (1, 1, E), dtype=jnp.float32)
    positions = jax.random.normal(k_pos, (N + 1, E), dtype=jnp.float32)

    out = patch_embedding(x, conv_w, conv_b, cls_token, positions, P)
    out = jax.block_until_ready(out)

    ref = patch_embedding_ref(x, conv_w, conv_b, cls_token, positions, P)
    ref = jax.block_until_ready(ref)

    assert out.shape == (B, N + 1, E), out.shape
    # bf16 patch/weight inputs (f32 MXU accumulation) -> looser tolerance than
    # a pure-f32 comparison.
    err = float(jnp.max(jnp.abs(out - ref)))
    assert err < 2e-2, err
    print("KERNEL_OK")
</pallas_src>

<mosaic_0001>
module attributes {stable_mosaic.version = 11 : i64} {
  func.func @_patch_embed_kernel(%arg0: i32, %arg1: memref<24x128xbf16, #tpu.memory_space<vmem>>, %arg2: memref<128x128xbf16, #tpu.memory_space<vmem>>, %arg3: memref<24x128xf32, #tpu.memory_space<vmem>>, %arg4: memref<24x128xf32, #tpu.memory_space<vmem>>) attributes {dimension_semantics = [#tpu.dimension_semantics<parallel>], iteration_bounds = array<i64: 2>, scalar_prefetch = 0 : i64, scratch_operands = 0 : i64, tpu.core_type = #tpu.core_type<tc>, window_params = [{transform_indices = @transform_0, window_bounds = array<i64: 24, 128>}, {pipeline_mode = #tpu.pipeline_mode<synchronous>, transform_indices = @transform_1, window_bounds = array<i64: 128, 128>}, {pipeline_mode = #tpu.pipeline_mode<synchronous>, transform_indices = @transform_2, window_bounds = array<i64: 24, 128>}, {transform_indices = @transform_3, window_bounds = array<i64: 24, 128>}]} {
    %c0 = arith.constant 0 : index
    %c0_0 = arith.constant 0 : index
    %0 = vector.load %arg1[%c0, %c0_0] : memref<24x128xbf16, #tpu.memory_space<vmem>>, vector<24x128xbf16>
    %c0_1 = arith.constant 0 : index
    %c0_2 = arith.constant 0 : index
    %1 = vector.load %arg2[%c0_1, %c0_2] : memref<128x128xbf16, #tpu.memory_space<vmem>>, vector<128x128xbf16>
    %cst = arith.constant dense<0.000000e+00> : vector<24x128xf32>
    %2 = tpu.matmul %0, %1, %cst {dimension_numbers = #tpu.dot_dimension_numbers<[1], [0], [0], [1], [0, 0, 1, 1], [], []>} : vector<24x128xbf16>, vector<128x128xbf16>, vector<24x128xf32> -> vector<24x128xf32>
    %c0_3 = arith.constant 0 : index
    %c0_4 = arith.constant 0 : index
    %3 = vector.load %arg3[%c0_3, %c0_4] : memref<24x128xf32, #tpu.memory_space<vmem>>, vector<24x128xf32>
    %4 = arith.addf %2, %3 : vector<24x128xf32>
    %c0_5 = arith.constant 0 : index
    %c0_6 = arith.constant 0 : index
    %5 = vector.load %arg4[%c0_5, %c0_6] : memref<24x128xf32, #tpu.memory_space<vmem>>, vector<24x128xf32>
    tpu.vector_store %arg4[%c0_5, %c0_6], %4 {strides = array<i32>} : memref<24x128xf32, #tpu.memory_space<vmem>>, vector<24x128xf32>,
    return
  }
  func.func @transform_0(%arg0: i32) -> (i32, i32) {
    %c0_i32 = arith.constant 0 : i32
    %c0_i32_0 = arith.constant 0 : i32
    return %arg0, %c0_i32 : i32, i32
  }
  func.func @transform_1(%arg0: i32) -> (i32, i32) {
    %c0_i32 = arith.constant 0 : i32
    %c0_i32_0 = arith.constant 0 : i32
    %c0_i32_1 = arith.constant 0 : i32
    return %c0_i32, %c0_i32_0 : i32, i32
  }
  func.func @transform_2(%arg0: i32) -> (i32, i32) {
    %c0_i32 = arith.constant 0 : i32
    %c0_i32_0 = arith.constant 0 : i32
    %c0_i32_1 = arith.constant 0 : i32
    return %c0_i32, %c0_i32_0 : i32, i32
  }
  func.func @transform_3(%arg0: i32) -> (i32, i32) {
    %c0_i32 = arith.constant 0 : i32
    %c0_i32_0 = arith.constant 0 : i32
    return %arg0, %c0_i32 : i32, i32
  }
}

</mosaic_0001>

<llo_original>
// kernel: tpu_custom_call.1
$region0: #{tpu_custom_call.1}
  #allocation0 [shape = 'u32[]', space=smem, size = 0x4, offset = 0x4, fixed_abs, tag = 'smem constant byte address 0x4 - core index']
  #allocation1 [shape = 'u32[144,128]{1,0:T(1,128)}', space=vmem, size = 0x12000, scoped, tag = 'internal scratch']
  %s0 = inlined_call_operand.hbm [shape: bf16[48,128], index: 0, kind: input, shape index: {}]
  %s1 = inlined_call_operand.hbm [shape: bf16[128,128], index: 1, kind: input, shape index: {}]
  %s2 = inlined_call_operand.hbm [shape: f32[24,128], index: 2, kind: input, shape index: {}]
  %s3 = inlined_call_operand.hbm [shape: f32[48,128], index: 3, kind: output, shape index: {}]
  %s4 = sld [smem:[#allocation0]]
  $region57: #{tpu_custom_call.1} parent=0
    _
  %s6 = ssub.s32 1, %s4
  %s7 = scalar_select 0, %s6, %s4
  $region1: #{tpu_custom_call.1} parent=0
    #allocation2 [shape = 'u8[12288]{0}', space=vmem, size = 0x3000, scoped, tag = 'input window, operand 0']
    #allocation3 [shape = 's32[2]{0}', space=sflag, size = 0x8, scoped, tag = 'scoped memory for tpu_custom_call.1']
    #allocation4 [shape = 's32[2]{0}', space=sflag, size = 0x8, scoped, tag = 'scoped memory for tpu_custom_call.1']
    #allocation5 [shape = 'u8[32768]{0}', space=vmem, size = 0x8000, scoped, tag = 'input window, operand 1, single buffered']
    #allocation6 [shape = 's32[1]{0}', space=sflag, size = 0x4, scoped, tag = 'scoped memory for tpu_custom_call.1']
    #allocation7 [shape = 'u8[12288]{0}', space=vmem, size = 0x3000, scoped, tag = 'input window, operand 2, single buffered']
    #allocation8 [shape = 'u8[24576]{0}', space=vmem, size = 0x6000, scoped, tag = 'output window, operand 0']
    %8 = vsyncpa [#allocation3], 0
    %s9 = scalar_lea.sflag [#allocation3], 1
    %10 = vsyncpa %s9, 0
    %11 = vsyncpa [#allocation6], 0
    %12 = vsyncpa [#allocation4], 0
    %s13 = scalar_lea.sflag [#allocation4], 1
    %14 = vsyncpa %s13, 0
    loop: start=0, step=1, limit=4
    $region2: #{tpu_custom_call.1} parent=1 // loop_pre_header
      _
    $region3: #{tpu_custom_call.1} parent=1 // loop_header
      %s16 = sphi 0, %s20
      %p17 = scmp.ge.s32.totalorder %s16, 4
      %s26 = sphi 0, %s28
      %s29 = sphi 0, %s26
      %s30 = sphi 0, %s29
      %s46 = sphi 0, %s30
      %s50 = sphi 0, %s50
      %s52 = sphi 0, %s50
      %s53 = sphi 0, %s52
      %s67 = sphi 0, %s53
      %s71 = sphi 0, %s71
      %s73 = sphi 0, %s71
      %s74 = sphi 0, %s73
      %s88 = sphi 0, %s74
      %s94 = sphi 0, %s96
      %s97 = sphi 0, %s94
      %s98 = sphi 0, %s97
      %s114 = sphi 0, %s98
    $region4: #{tpu_custom_call.1} parent=1 // loop_header_branch
      %19 = sbr.rel (%p17) target = $region8
    $region5: #{tpu_custom_call.1} parent=1 // loop_body
      %s21 = ssub.s32 %s16, 1
      %s22 = ssub.s32 %s16, 2
      %s23 = sadd.s32 %s16, 1
      %s24 = ssub.s32 %s16, %s23
      %p25 = scmp.eq.s32.totalorder %s24, 0
      %s27 = sadd.s32 %s26, 1
      %s28 = scalar_select %p25, %s26, %s27
      %p31 = pneg %p25
      %p32 = scmp.eq.s32.totalorder %s16, 1
      %p33 = por %p31, %p32
      %p34 = scmp.ne.s32.totalorder %s26, %s29
      %p35 = scmp.eq.s32.totalorder %s16, 0
      %p36 = por %p34, %p35
      %p37 = scmp.ne.s32.totalorder %s26, %s29
      %p38 = scmp.eq.s32.totalorder %s21, 1
      %p39 = por %p37, %p38
      %p40 = scmp.ne.s32.totalorder %s29, %s30
      %p41 = scmp.eq.s32.totalorder %s21, 0
      %p42 = por %p40, %p41
      %p43 = scmp.ne.s32.totalorder %s29, %s30
      %p44 = scmp.eq.s32.totalorder %s22, 1
      %p45 = por %p43, %p44
      %p47 = scmp.ne.s32.totalorder %s30, %s46
      %p48 = scmp.eq.s32.totalorder %s22, 0
      %p49 = por %p47, %p48
      %s51 = sadd.s32 %s50, 1
      %p54 = scmp.eq.s32.totalorder %s16, 1
      %p55 = scmp.ne.s32.totalorder %s50, %s52
      %p56 = scmp.eq.s32.totalorder %s16, 0
      %p57 = por %p55, %p56
      %p58 = scmp.ne.s32.totalorder %s50, %s52
      %p59 = scmp.eq.s32.totalorder %s21, 1
      %p60 = por %p58, %p59
      %p61 = scmp.ne.s32.totalorder %s52, %s53
      %p62 = scmp.eq.s32.totalorder %s21, 0
      %p63 = por %p61, %p62
      %p64 = scmp.ne.s32.totalorder %s52, %s53
      %p65 = scmp.eq.s32.totalorder %s22, 1
      %p66 = por %p64, %p65
      %p68 = scmp.ne.s32.totalorder %s53, %s67
      %p69 = scmp.eq.s32.totalorder %s22, 0
      %p70 = por %p68, %p69
      %s72 = sadd.s32 %s71, 1
      %p75 = scmp.eq.s32.totalorder %s16, 1
      %p76 = scmp.ne.s32.totalorder %s71, %s73
      %p77 = scmp.eq.s32.totalorder %s16, 0
      %p78 = por %p76, %p77
      %p79 = scmp.ne.s32.totalorder %s71, %s73
      %p80 = scmp.eq.s32.totalorder %s21, 1
      %p81 = por %p79, %p80
      %p82 = scmp.ne.s32.totalorder %s73, %s74
      %p83 = scmp.eq.s32.totalorder %s21, 0
      %p84 = por %p82, %p83
      %p85 = scmp.ne.s32.totalorder %s73, %s74
      %p86 = scmp.eq.s32.totalorder %s22, 1
      %p87 = por %p85, %p86
      %p89 = scmp.ne.s32.totalorder %s74, %s88
      %p90 = scmp.eq.s32.totalorder %s22, 0
      %p91 = por %p89, %p90
      %s92 = ssub.s32 %s16, %s23
      %p93 = scmp.eq.s32.totalorder %s92, 0
      %s95 = sadd.s32 %s94, 1
      %s96 = scalar_select %p93, %s94, %s95
      %p99 = pneg %p93
      %p100 = scmp.eq.s32.totalorder %s16, 1
      %p101 = por %p99, %p100
      %p102 = scmp.ne.s32.totalorder %s94, %s97
      %p103 = scmp.eq.s32.totalorder %s16, 0
      %p104 = por %p102, %p103
      %p105 = scmp.ne.s32.totalorder %s94, %s97
      %p106 = scmp.eq.s32.totalorder %s21, 1
      %p107 = por %p105, %p106
      %p108 = scmp.ne.s32.totalorder %s97, %s98
      %p109 = scmp.eq.s32.totalorder %s21, 0
      %p110 = por %p108, %p109
      %p111 = scmp.ne.s32.totalorder %s97, %s98
      %p112 = scmp.eq.s32.totalorder %s22, 1
      %p113 = por %p111, %p112
      %p115 = scmp.ne.s32.totalorder %s98, %s114
      %p116 = scmp.eq.s32.totalorder %s22, 0
      %p117 = por %p115, %p116
      %p118 = scmp.le.s32.totalorder 1, %s16
      %p119 = scmp.lt.s32.totalorder %s16, 3
      %p120 = pnand %p118, %p119
      %p121 = pneg %p120
      // Predicated region
      $region9: #{tpu_custom_call.1} parent=5 // pred_check
        _
      $region10: #{tpu_custom_call.1} parent=5 // pred_check_branch
        %123 = sbr.rel (%p120) target = $region12
      $region11: #{tpu_custom_call.1} parent=5 // pred_region
        %s124 = ssub.s32 %s16, 1
        // Predicated region
        $region13: #{tpu_custom_call.1} parent=11 // pred_check
          %p125 = pneg %p63
        $region14: #{tpu_custom_call.1} parent=11 // pred_check_branch
          %127 = sbr.rel (%p125) target = $region16
        $region15: #{tpu_custom_call.1} parent=11 // pred_region
          %s129 = ssub.s32 1024, 1024
          %130 = vsyncadd [#allocation6], %s129
          %s131 = sshll.u32 [#allocation5], 4
          %s132 = int_to_ptr.vmem [resolvable:$true] %s131
          %137 = dma.hbm_to_vmem [thread:$0]  %s1, 1024, %s132, [#allocation6], 64, 64, 4
        $region16: #{tpu_custom_call.1} parent=11 // pred_fallthru
          _
        // Predicated region
        $region17: #{tpu_custom_call.1} parent=11 // pred_check
          %p138 = pneg %p84
        $region18: #{tpu_custom_call.1} parent=11 // pred_check_branch
          %140 = sbr.rel (%p138) target = $region20
        $region19: #{tpu_custom_call.1} parent=11 // pred_region
          %s142 = ssub.s32 384, 384
          %143 = vsyncadd [#allocation6], %s142
          %s144 = sshll.u32 [#allocation7], 4
          %s145 = int_to_ptr.vmem [resolvable:$true] %s144
          %150 = dma.hbm_to_vmem [thread:$0]  %s2, 384, %s145, [#allocation6], 128, 128, 8
        $region20: #{tpu_custom_call.1} parent=11 // pred_fallthru
          _
      $region12: #{tpu_custom_call.1} parent=5 // pred_fallthru
        _
      %p151 = scmp.lt.s32.totalorder %s16, 2
      // Predicated region
      $region21: #{tpu_custom_call.1} parent=5 // pred_check
        %p152 = pneg %p151
      $region22: #{tpu_custom_call.1} parent=5 // pred_check_branch
        %154 = sbr.rel (%p152) target = $region24
      $region23: #{tpu_custom_call.1} parent=5 // pred_region
        // Predicated region
        $region25: #{tpu_custom_call.1} parent=23 // pred_check
          %p155 = pneg %p36
        $region26: #{tpu_custom_call.1} parent=23 // pred_check_branch
          %157 = sbr.rel (%p155) target = $region28
        $region27: #{tpu_custom_call.1} parent=23 // pred_region
          %s158 = sand.u32 %s26, 1
          %s159 = scalar_lea.sflag [#allocation3], %s158
          %s160 = sand.u32 %s26, 1
          %s161 = smul.addr %s160, 12
          %s162 = scalar_lea.vmem [#allocation2], %s161
          %s163 = smul.u32 3, %s16
          %s165 = ssub.s32 192, 192
          %166 = vsyncadd %s159, %s165
          %s167 = smul.addr %s163, 64
          %s168 = scalar_lea.hbm %s0, %s167
          %s169 = sshll.u32 %s162, 4
          %s170 = int_to_ptr.vmem [resolvable:$true] %s169
          %175 = dma.hbm_to_vmem [thread:$0]  %s168, 192, %s170, %s159, 64, 64, 4
        $region28: #{tpu_custom_call.1} parent=23 // pred_fallthru
          _
      $region24: #{tpu_custom_call.1} parent=5 // pred_fallthru
        _
      %p176 = scmp.le.s32.totalorder 1, %s16
      %p177 = scmp.lt.s32.totalorder %s16, 3
      %p178 = pnand %p176, %p177
      %p179 = pneg %p178
      // Predicated region
      $region29: #{tpu_custom_call.1} parent=5 // pred_check
        _
      $region30: #{tpu_custom_call.1} parent=5 // pred_check_branch
        %181 = sbr.rel (%p178) target = $region32
      $region31: #{tpu_custom_call.1} parent=5 // pred_region
        %s182 = ssub.s32 %s16, 1
        %s183 = sand.u32 %s29, 1
        %s184 = scalar_lea.sflag [#allocation3], %s183
        %s185 = sand.u32 %s29, 1
        %s186 = smul.addr %s185, 12
        %s187 = scalar_lea.vmem [#allocation2], %s186
        // Predicated region
        $region33: #{tpu_custom_call.1} parent=31 // pred_check
          %p188 = pneg %p42
        $region34: #{tpu_custom_call.1} parent=31 // pred_check_branch
          %190 = sbr.rel (%p188) target = $region36
        $region35: #{tpu_custom_call.1} parent=31 // pred_region
          %191 = dma.done %s184, 192
        $region36: #{tpu_custom_call.1} parent=31 // pred_fallthru
          _
        // Predicated region
        $region37: #{tpu_custom_call.1} parent=31 // pred_check
          %p192 = pneg %p63
        $region38: #{tpu_custom_call.1} parent=31 // pred_check_branch
          %194 = sbr.rel (%p192) target = $region40
        $region39: #{tpu_custom_call.1} parent=31 // pred_region
          %195 = dma.done [#allocation6], 1024
        $region40: #{tpu_custom_call.1} parent=31 // pred_fallthru
          _
        // Predicated region
        $region41: #{tpu_custom_call.1} parent=31 // pred_check
          %p196 = pneg %p84
        $region42: #{tpu_custom_call.1} parent=31 // pred_check_branch
          %198 = sbr.rel (%p196) target = $region44
        $region43: #{tpu_custom_call.1} parent=31 // pred_region
          %199 = dma.done [#allocation6], 384
        $region44: #{tpu_custom_call.1} parent=31 // pred_fallthru
          _
        %s200 = sand.u32 %s29, 1
        %s201 = scalar_lea.sflag [#allocation3], %s200
        %s202 = sand.u32 %s29, 1
        %s203 = smul.addr %s202, 12
        %s204 = scalar_lea.vmem [#allocation2], %s203
        %p205 = pneg %p42
        %p206 = pneg %p39
        %p207 = pneg %p63
        %p208 = pneg %p60
        %p209 = pneg %p84
        %p210 = pneg %p81
        %p211 = pneg %p110
        %p212 = pneg %p107
        %s213 = sand.u32 %s97, 1
        %s214 = scalar_lea.sflag [#allocation4], %s213
        %s215 = sand.u32 %s97, 1
        %s216 = smul.addr %s215, 24
        %s217 = scalar_lea.vmem [#allocation8], %s216
        %s218 = smul.u32 3, %s21
        %s219 = smul.u32 3, %s21
        %v221 = vld [vmem:[%s187] sm:$0xf]
        %v222 = vld [vmem:[%s187 + $0x4] sm:$0xf]
        %v223 = vld [vmem:[%s187 + $0x8] sm:$0xf]
        %v224 = vld [vmem:[#allocation5] sm:$0xf]
        %v225 = vld [vmem:[#allocation5 + $0x4] sm:$0xf]
        %v226 = vld [vmem:[#allocation5 + $0x8] sm:$0xf]
        %v227 = vld [vmem:[#allocation5 + $0xc] sm:$0xf]
        %v228 = vld [vmem:[#allocation5 + $0x10] sm:$0xf]
        %v229 = vld [vmem:[#allocation5 + $0x14] sm:$0xf]
        %v230 = vld [vmem:[#allocation5 + $0x18] sm:$0xf]
        %v231 = vld [vmem:[#allocation5 + $0x1c] sm:$0xf]
        %v232 = vld [vmem:[#allocation5 + $0x20] sm:$0xf]
        %v233 = vld [vmem:[#allocation5 + $0x24] sm:$0xf]
        %v234 = vld [vmem:[#allocation5 + $0x28] sm:$0xf]
        %v235 = vld [vmem:[#allocation5 + $0x2c] sm:$0xf]
        %v236 = vld [vmem:[#allocation5 + $0x30] sm:$0xf]
        %v237 = vld [vmem:[#allocation5 + $0x34] sm:$0xf]
        %v238 = vld [vmem:[#allocation5 + $0x38] sm:$0xf]
        %v239 = vld [vmem:[#allocation5 + $0x3c] sm:$0xf]
        %v240 = vld [vmem:[#allocation7] sm:$0xff]
        %v241 = vld [vmem:[#allocation7 + $0x8] sm:$0xff]
        %v242 = vld [vmem:[#allocation7 + $0x10] sm:$0xff]
        %v246 = vunpack.c.l.b16 %v221
        %v247 = vunpack.c.l.b16 %v222
        %v248 = vunpack.c.l.b16 %v223
        %v249 = vpack.c.b16 %v247, %v246
        %v250 = vpack.c.b16 %v248, %v248
        %v269 = vunpack.c.l.b16 %v224
        %v270 = vunpack.c.l.b16 %v225
        %v271 = vunpack.c.l.b16 %v226
        %v272 = vunpack.c.l.b16 %v227
        %v273 = vunpack.c.l.b16 %v228
        %v274 = vunpack.c.l.b16 %v229
        %v275 = vunpack.c.l.b16 %v230
        %v276 = vunpack.c.l.b16 %v231
        %v277 = vunpack.c.l.b16 %v232
        %v278 = vunpack.c.l.b16 %v233
        %v279 = vunpack.c.l.b16 %v234
        %v280 = vunpack.c.l.b16 %v235
        %v281 = vunpack.c.l.b16 %v236
        %v282 = vunpack.c.l.b16 %v237
        %v283 = vunpack.c.l.b16 %v238
        %v284 = vunpack.c.l.b16 %v239
        %v285 = vpack.c.b16 %v270, %v269
        %v286 = vpack.c.b16 %v272, %v271
        %v287 = vpack.c.b16 %v274, %v273
        %v288 = vpack.c.b16 %v276, %v275
        %v289 = vpack.c.b16 %v278, %v277
        %v290 = vpack.c.b16 %v280, %v279
        %v291 = vpack.c.b16 %v282, %v281
        %v292 = vpack.c.b16 %v284, %v283
        %301 = vmatprep.subr.bf16.mxu0 0
        %302 = vmatpush1.bf16.msra.mxu0 %v285
        %303 = vmatprep.subr.bf16.mxu0 0
        %304 = vmatpush1.bf16.msra.mxu0 %v286
        %305 = vmatprep.subr.bf16.mxu0 0
        %306 = vmatpush1.bf16.msra.mxu0 %v287
        %307 = vmatprep.subr.bf16.mxu0 0
        %308 = vmatpush1.bf16.msra.mxu0 %v288
        %309 = vmatprep.subr.bf16.mxu0 0
        %310 = vmatpush1.bf16.msra.mxu0 %v289
        %311 = vmatprep.subr.bf16.mxu0 0
        %312 = vmatpush1.bf16.msra.mxu0 %v290
        %313 = vmatprep.subr.bf16.mxu0 0
        %314 = vmatpush1.bf16.msra.mxu0 %v291
        %315 = vmatprep.subr.bf16.mxu0 0
        %316 = vmatpush1.bf16.msra.mxu0 %v292
        %317 = vmatprep.subr.bf16.mxu0 0
        %318 = vmatpush1.bf16.msra.mxu0 0
        %319 = vmatprep.subr.bf16.mxu0 0
        %320 = vmatpush1.bf16.msra.mxu0 0
        %321 = vmatprep.subr.bf16.mxu0 0
        %322 = vmatpush1.bf16.msra.mxu0 0
        %323 = vmatprep.subr.bf16.mxu0 0
        %324 = vmatpush1.bf16.msra.mxu0 0
        %325 = vmatprep.subr.bf16.mxu0 0
        %326 = vmatpush1.bf16.msra.mxu0 0
        %327 = vmatprep.subr.bf16.mxu0 0
        %328 = vmatpush1.bf16.msra.mxu0 0
        %329 = vmatprep.subr.bf16.mxu0 0
        %330 = vmatpush1.bf16.msra.mxu0 0
        %331 = vmatprep.subr.bf16.mxu0 0
        %332 = vmatpush1.bf16.msra.mxu0 0
        %333 = vmatprep.mubr.bf16.mxu0 0
        %334 = vmatmul.mubr.bf16.gmra.mrb[0].mxu0 %v249
        %v335 = vpop.f32.mrb[0].mxu0
        %v336 = vadd.f32 %v240, %v335
        %v337 = vpop.f32.mrb[0].mxu0
        %v338 = vpop.f32.mrb[0].mxu0
        %v339 = vadd.f32 %v241, %v338
        %v340 = vpop.f32.mrb[0].mxu0
        %341 = vmatprep.mubr.bf16.mxu0 0
        %342 = vmatmul.mubr.bf16.gmra.mrb[0].mxu0 %v250
        %v343 = vpop.f32.mrb[0].mxu0
        %v344 = vadd.f32 %v242, %v343
        %v345 = vpop.f32.mrb[0].mxu0
        %v346 = vpop.f32.mrb[0].mxu0
        %v347 = vpop.f32.mrb[0].mxu0
        %348 = vdwg.mxu0
        %349 = vst [vmem:[%s217] sm:$0xff] %v336
        %350 = vst [vmem:[%s217 + $0x8] sm:$0xff] %v339
        %351 = vst [vmem:[%s217 + $0x10] sm:$0xff] %v344
        %s352 = sand.u32 %s97, 1
        %s353 = scalar_lea.sflag [#allocation4], %s352
        %s354 = sand.u32 %s97, 1
        %s355 = smul.addr %s354, 24
        %s356 = scalar_lea.vmem [#allocation8], %s355
        // Predicated region
        $region45: #{tpu_custom_call.1} parent=31 // pred_check
          %p357 = pneg %p107
        $region46: #{tpu_custom_call.1} parent=31 // pred_check_branch
          %359 = sbr.rel (%p357) target = $region48
        $region47: #{tpu_custom_call.1} parent=31 // pred_region
          %s360 = smul.u32 3, %s21
          %s362 = ssub.s32 384, 384
          %363 = vsyncadd %s353, %s362
          %s364 = smul.addr %s360, 128
          %s365 = scalar_lea.hbm %s3, %s364
          %s366 = sshll.u32 %s356, 4
          %s367 = int_to_ptr.vmem [resolvable:$true] %s366
          %372 = dma.vmem_to_hbm [thread:$0]  %s367, 384, %s365, %s353, 128, 128, 8
        $region48: #{tpu_custom_call.1} parent=31 // pred_fallthru
          _
      $region32: #{tpu_custom_call.1} parent=5 // pred_fallthru
        _
      %p373 = scmp.le.s32.totalorder 2, %s16
      // Predicated region
      $region49: #{tpu_custom_call.1} parent=5 // pred_check
        %p374 = pneg %p373
      $region50: #{tpu_custom_call.1} parent=5 // pred_check_branch
        %376 = sbr.rel (%p374) target = $region52
      $region51: #{tpu_custom_call.1} parent=5 // pred_region
        %s377 = ssub.s32 %s16, 2
        // Predicated region
        $region53: #{tpu_custom_call.1} parent=51 // pred_check
          %p378 = pneg %p113
        $region54: #{tpu_custom_call.1} parent=51 // pred_check_branch
          %380 = sbr.rel (%p378) target = $region56
        $region55: #{tpu_custom_call.1} parent=51 // pred_region
          %s381 = sand.u32 %s98, 1
          %s382 = scalar_lea.sflag [#allocation4], %s381
          %s383 = sand.u32 %s98, 1
          %s384 = smul.addr %s383, 24
          %s385 = scalar_lea.vmem [#allocation8], %s384
          %386 = dma.done %s382, 384
        $region56: #{tpu_custom_call.1} parent=51 // pred_fallthru
          _
      $region52: #{tpu_custom_call.1} parent=5 // pred_fallthru
        _
    $region6: #{tpu_custom_call.1} parent=1 // loop_footer
      %s20 = sadd.s32 1, %s16
    $region7: #{tpu_custom_call.1} parent=1 // loop_footer_branch
      %15 = sbr.rel target = $region3
    $region8: #{tpu_custom_call.1} parent=1 // loop_exit
      _
    %387 = vsyncpa [#allocation3], 1
    %s388 = scalar_lea.sflag [#allocation3], 1
    %389 = vsyncpa %s388, 1
    %390 = vsyncpa [#allocation6], 1
    %391 = vsyncpa [#allocation4], 1
    %s392 = scalar_lea.sflag [#allocation4], 1
    %393 = vsyncpa %s392, 1

</llo_original>
